<compile_context>
chip_gen: v5e
topology: v5e:2x2
jax: 0.10.0
libtpu: 0.0.40
codegen_flags: <defaults>
</compile_context>

<pallas_src>
import jax
import jax.numpy as jnp
from jax.experimental import pallas as pl
from jax.experimental.pallas import tpu as pltpu

NEGATIVE_SLOPE = 0.01


def tiny_perceptron_kernel(x_ref, w1_ref, b1_ref, w2_ref, b2_ref, o_ref):
    # In-kernel cast f32 -> bf16 (VPU); avoids a wrapper-side HBM round-trip.
    x = x_ref[...].astype(jnp.bfloat16)
    # fc1: [TB, 784] bf16 @ [784, 32] bf16 -> f32 accumulation on the MXU.
    h = jnp.dot(x, w1_ref[...], preferred_element_type=jnp.float32)
    h = h + b1_ref[...]                                  # f32 VPU
    # LeakyReLU(negative_slope=0.01), f32 (matches PyTorch at h == 0).
    h = jnp.where(h > 0, h, NEGATIVE_SLOPE * h)          # f32 VPU
    # fc2: cast hidden to bf16 for the MXU, accumulate in f32.
    out = jnp.dot(h.astype(jnp.bfloat16), w2_ref[...],
                  preferred_element_type=jnp.float32)
    out = out + b2_ref[...]                              # f32 VPU
    o_ref[...] = out.astype(o_ref.dtype)


def tiny_perceptron(x, w1, b1, w2, b2, *, block_b=1024):
    """x: [B, 784] f32; w1: [784, 32]; b1: [1, 32]; w2: [32, 10]; b2: [1, 10].

    Returns f32 [B, 10]. Matmul operands are cast to bf16 inside the kernel
    (f32 accumulation); x is streamed to VMEM as f32 (no wrapper copies of x).
    """
    B, d_in = x.shape
    d_hidden = w1.shape[1]
    d_out = w2.shape[1]

    # Batch-tile selection (no padding, no wrapper copies of x):
    #  * B <= block_b: one block covering the whole batch. A block dim equal to
    #    the full array dim satisfies the (8,128) rule for any B.
    #  * B  > block_b: TB = block_b rounded to a multiple of 16 (bf16 sublane
    #    packing); Pallas masks the ragged last block (rows are independent).
    if B <= block_b:
        TB = B
    else:
        TB = max(16, (block_b // 16) * 16)
    grid = (pl.cdiv(B, TB),)

    # Weights/biases are tiny (<0.2 MiB total); casting them in the wrapper is
    # negligible HBM traffic and keeps the in-kernel MXU feed bf16.
    x_f = x.astype(jnp.float32)
    w1_bf = w1.astype(jnp.bfloat16)
    w2_bf = w2.astype(jnp.bfloat16)
    b1_f = b1.astype(jnp.float32).reshape(1, d_hidden)
    b2_f = b2.astype(jnp.float32).reshape(1, d_out)

    out = pl.pallas_call(
        tiny_perceptron_kernel,
        out_shape=jax.ShapeDtypeStruct((B, d_out), jnp.float32),
        grid_spec=pltpu.PrefetchScalarGridSpec(
            num_scalar_prefetch=0,
            grid=grid,
            in_specs=[
                # x: tiled along batch, double-buffered by the pipeline.
                pl.BlockSpec((TB, d_in), lambda i: (i, 0)),
                # Weights / biases: constant block index -> stay VMEM-resident.
                pl.BlockSpec((d_in, d_hidden), lambda i: (0, 0)),
                pl.BlockSpec((1, d_hidden), lambda i: (0, 0)),
                pl.BlockSpec((d_hidden, d_out), lambda i: (0, 0)),
                pl.BlockSpec((1, d_out), lambda i: (0, 0)),
            ],
            out_specs=pl.BlockSpec((TB, d_out), lambda i: (i, 0)),
        ),
        compiler_params=pltpu.CompilerParams(
            # Batch tiles are independent. On v7x, pltpu.CORE_PARALLEL here (or
            # pl.core_map) is the next step to split tiles across the 2 TCs;
            # kept as "parallel" for clean compiles on every generation.
            dimension_semantics=("parallel",),
        ),
    )(x_f, w1_bf, b1_f, w2_bf, b2_f)
    return out


def init_params(key):
    """Deterministic init mimicking nn.Linear's uniform(-1/sqrt(fan_in), 1/sqrt(fan_in))."""
    k1, k2, k3, k4 = jax.random.split(key, 4)
    bound1 = 1.0 / jnp.sqrt(784.0)
    bound2 = 1.0 / jnp.sqrt(32.0)
    w1 = jax.random.uniform(k1, (784, 32), jnp.float32, -bound1, bound1)
    b1 = jax.random.uniform(k2, (1, 32), jnp.float32, -bound1, bound1)
    w2 = jax.random.uniform(k3, (32, 10), jnp.float32, -bound2, bound2)
    b2 = jax.random.uniform(k4, (1, 10), jnp.float32, -bound2, bound2)
    return w1, b1, w2, b2


def reference_forward_f32(x, w1, b1, w2, b2):
    h = x @ w1 + b1
    h = jnp.where(h > 0, h, NEGATIVE_SLOPE * h)
    return h @ w2 + b2


def reference_forward_bf16(x, w1, b1, w2, b2):
    """Same bf16-operand / f32-accumulate recipe as the kernel."""
    h = jnp.dot(x.astype(jnp.bfloat16), w1.astype(jnp.bfloat16),
                preferred_element_type=jnp.float32) + b1
    h = jnp.where(h > 0, h, NEGATIVE_SLOPE * h)
    return jnp.dot(h.astype(jnp.bfloat16), w2.astype(jnp.bfloat16),
                   preferred_element_type=jnp.float32) + b2


if __name__ == "__main__":
    key = jax.random.PRNGKey(0)
    kx, kp, kx2 = jax.random.split(key, 3)
    w1, b1, w2, b2 = init_params(kp)

    # 1) Small-batch check (single partial block; correctness only).
    B = 2
    x = jax.random.normal(kx, (B, 784), jnp.float32)
    out = jax.block_until_ready(tiny_perceptron(x, w1, b1, w2, b2))
    assert out.shape == (B, 10)
    ref_bf16 = reference_forward_bf16(x, w1, b1, w2, b2)
    ref_f32 = reference_forward_f32(x, w1, b1, w2, b2)
    assert jnp.allclose(out, ref_bf16, atol=1e-3, rtol=1e-3), "mismatch vs bf16 reference"
    assert jnp.allclose(out, ref_f32, atol=5e-2, rtol=5e-2), "mismatch vs f32 reference"

    # 2) Single-block large-ish batch with the default tile (B <= block_b path).
    B2 = 1000
    x2 = jax.random.normal(kx2, (B2, 784), jnp.float32)
    out2 = jax.block_until_ready(tiny_perceptron(x2, w1, b1, w2, b2))
    assert out2.shape == (B2, 10)
    ref2 = reference_forward_bf16(x2, w1, b1, w2, b2)
    assert jnp.allclose(out2, ref2, atol=1e-3, rtol=1e-3), "mismatch vs bf16 reference (single block)"

    # 3) Multi-tile check with a ragged last block (B=1000, TB=256 -> grid=4,
    #    last block covers 232 valid rows; exercises the masked OOB path).
    out3 = jax.block_until_ready(tiny_perceptron(x2, w1, b1, w2, b2, block_b=256))
    assert out3.shape == (B2, 10)
    assert jnp.allclose(out3, ref2, atol=1e-3, rtol=1e-3), "mismatch vs bf16 reference (ragged tiles)"

    print("KERNEL_OK")
</pallas_src>

<mosaic_0001>
module attributes {stable_mosaic.version = 11 : i64} {
  func.func @tiny_perceptron_kernel(%arg0: i32, %arg1: memref<2x784xf32, #tpu.memory_space<vmem>>, %arg2: memref<784x32xbf16, #tpu.memory_space<vmem>>, %arg3: memref<1x32xf32, #tpu.memory_space<vmem>>, %arg4: memref<32x10xbf16, #tpu.memory_space<vmem>>, %arg5: memref<1x10xf32, #tpu.memory_space<vmem>>, %arg6: memref<2x10xf32, #tpu.memory_space<vmem>>) attributes {dimension_semantics = [#tpu.dimension_semantics<parallel>], iteration_bounds = array<i64: 1>, scalar_prefetch = 0 : i64, scratch_operands = 0 : i64, tpu.core_type = #tpu.core_type<tc>, window_params = [{transform_indices = @transform_0, window_bounds = array<i64: 2, 784>}, {pipeline_mode = #tpu.pipeline_mode<synchronous>, transform_indices = @transform_1, window_bounds = array<i64: 784, 32>}, {pipeline_mode = #tpu.pipeline_mode<synchronous>, transform_indices = @transform_2, window_bounds = array<i64: 1, 32>}, {pipeline_mode = #tpu.pipeline_mode<synchronous>, transform_indices = @transform_3, window_bounds = array<i64: 32, 10>}, {pipeline_mode = #tpu.pipeline_mode<synchronous>, transform_indices = @transform_4, window_bounds = array<i64: 1, 10>}, {transform_indices = @transform_5, window_bounds = array<i64: 2, 10>}]} {
    %c0 = arith.constant 0 : index
    %c0_0 = arith.constant 0 : index
    %0 = vector.load %arg1[%c0, %c0_0] : memref<2x784xf32, #tpu.memory_space<vmem>>, vector<2x784xf32>
    %1 = arith.truncf %0 : vector<2x784xf32> to vector<2x784xbf16>
    %c0_1 = arith.constant 0 : index
    %c0_2 = arith.constant 0 : index
    %2 = vector.load %arg2[%c0_1, %c0_2] : memref<784x32xbf16, #tpu.memory_space<vmem>>, vector<784x32xbf16>
    %cst = arith.constant dense<0.000000e+00> : vector<2x32xf32>
    %3 = tpu.matmul %1, %2, %cst {dimension_numbers = #tpu.dot_dimension_numbers<[1], [0], [0], [1], [0, 0, 1, 1], [], []>} : vector<2x784xbf16>, vector<784x32xbf16>, vector<2x32xf32> -> vector<2x32xf32>
    %c0_3 = arith.constant 0 : index
    %c0_4 = arith.constant 0 : index
    %4 = vector.load %arg3[%c0_3, %c0_4] : memref<1x32xf32, #tpu.memory_space<vmem>>, vector<1x32xf32>
    %5 = vector.broadcast %4 : vector<1x32xf32> to vector<2x32xf32>
    %6 = arith.addf %3, %5 : vector<2x32xf32>
    %cst_5 = arith.constant 0.000000e+00 : f32
    %7 = vector.broadcast %cst_5 : f32 to vector<2x32xf32>
    %8 = arith.cmpf ogt, %6, %7 : vector<2x32xf32>
    %cst_6 = arith.constant 0.00999999977 : f32
    %9 = vector.broadcast %cst_6 : f32 to vector<2x32xf32>
    %10 = arith.mulf %9, %6 : vector<2x32xf32>
    %11 = arith.select %8, %6, %10 : vector<2x32xi1>, vector<2x32xf32>
    %12 = arith.truncf %11 : vector<2x32xf32> to vector<2x32xbf16>
    %c0_7 = arith.constant 0 : index
    %c0_8 = arith.constant 0 : index
    %13 = vector.load %arg4[%c0_7, %c0_8] : memref<32x10xbf16, #tpu.memory_space<vmem>>, vector<32x10xbf16>
    %cst_9 = arith.constant dense<0.000000e+00> : vector<2x10xf32>
    %14 = tpu.matmul %12, %13, %cst_9 {dimension_numbers = #tpu.dot_dimension_numbers<[1], [0], [0], [1], [0, 0, 1, 1], [], []>} : vector<2x32xbf16>, vector<32x10xbf16>, vector<2x10xf32> -> vector<2x10xf32>
    %c0_10 = arith.constant 0 : index
    %c0_11 = arith.constant 0 : index
    %15 = vector.load %arg5[%c0_10, %c0_11] : memref<1x10xf32, #tpu.memory_space<vmem>>, vector<1x10xf32>
    %16 = vector.broadcast %15 : vector<1x10xf32> to vector<2x10xf32>
    %17 = arith.addf %14, %16 : vector<2x10xf32>
    %c0_12 = arith.constant 0 : index
    %c0_13 = arith.constant 0 : index
    %18 = vector.load %arg6[%c0_12, %c0_13] : memref<2x10xf32, #tpu.memory_space<vmem>>, vector<2x10xf32>
    tpu.vector_store %arg6[%c0_12, %c0_13], %17 {strides = array<i32>} : memref<2x10xf32, #tpu.memory_space<vmem>>, vector<2x10xf32>,
    return
  }
  func.func @transform_0(%arg0: i32) -> (i32, i32) {
    %c0_i32 = arith.constant 0 : i32
    %c0_i32_0 = arith.constant 0 : i32
    return %arg0, %c0_i32 : i32, i32
  }
  func.func @transform_1(%arg0: i32) -> (i32, i32) {
    %c0_i32 = arith.constant 0 : i32
    %c0_i32_0 = arith.constant 0 : i32
    %c0_i32_1 = arith.constant 0 : i32
    return %c0_i32, %c0_i32_0 : i32, i32
  }
  func.func @transform_2(%arg0: i32) -> (i32, i32) {
    %c0_i32 = arith.constant 0 : i32
    %c0_i32_0 = arith.constant 0 : i32
    %c0_i32_1 = arith.constant 0 : i32
    return %c0_i32, %c0_i32_0 : i32, i32
  }
  func.func @transform_3(%arg0: i32) -> (i32, i32) {
    %c0_i32 = arith.constant 0 : i32
    %c0_i32_0 = arith.constant 0 : i32
    %c0_i32_1 = arith.constant 0 : i32
    return %c0_i32, %c0_i32_0 : i32, i32
  }
  func.func @transform_4(%arg0: i32) -> (i32, i32) {
    %c0_i32 = arith.constant 0 : i32
    %c0_i32_0 = arith.constant 0 : i32
    %c0_i32_1 = arith.constant 0 : i32
    return %c0_i32, %c0_i32_0 : i32, i32
  }
  func.func @transform_5(%arg0: i32) -> (i32, i32) {
    %c0_i32 = arith.constant 0 : i32
    %c0_i32_0 = arith.constant 0 : i32
    return %arg0, %c0_i32 : i32, i32
  }
}

</mosaic_0001>

<llo_original>
// kernel: tpu_custom_call.1
$region0: #{tpu_custom_call.1}
  #allocation0 [shape = 'u32[]', space=smem, size = 0x4, offset = 0x4, fixed_abs, tag = 'smem constant byte address 0x4 - core index']
  #allocation1 [shape = 'u32[72,128]{1,0:T(1,128)}', space=vmem, size = 0x9000, scoped, tag = 'internal scratch']
  %s0 = inlined_call_operand.vmem [shape: f32[2,784], index: 0, kind: input, shape index: {}]
  %s1 = inlined_call_operand.vmem [shape: bf16[784,32], index: 1, kind: input, shape index: {}]
  %s2 = inlined_call_operand.vmem [shape: f32[1,32], index: 2, kind: input, shape index: {}]
  %s3 = inlined_call_operand.vmem [shape: bf16[32,10], index: 3, kind: input, shape index: {}]
  %s4 = inlined_call_operand.vmem [shape: f32[1,10], index: 4, kind: input, shape index: {}]
  %s5 = inlined_call_operand.hbm [shape: f32[2,10], index: 5, kind: output, shape index: {}]
  %s6 = sld [smem:[#allocation0]]
  $region30: #{tpu_custom_call.1} parent=0
    _
  %s8 = ssub.s32 1, %s6
  %s9 = scalar_select 0, %s8, %s6
  $region1: #{tpu_custom_call.1} parent=0
    #allocation2 [shape = 'u8[1024]{0}', space=vmem, size = 0x400, scoped, tag = 'output window, operand 0, single buffered']
    #allocation3 [shape = 's32[1]{0}', space=sflag, size = 0x4, scoped, tag = 'scoped memory for tpu_custom_call.1']
    %10 = vsyncpa [#allocation3], 0
    // Predicated region
    $region2: #{tpu_custom_call.1} parent=1 // pred_check
      _
    $region3: #{tpu_custom_call.1} parent=1 // pred_check_branch
      %12 = sbr.rel (0) target = $region5
    $region4: #{tpu_custom_call.1} parent=1 // pred_region
      _
    $region5: #{tpu_custom_call.1} parent=1 // pred_fallthru
      _
    // Predicated region
    $region6: #{tpu_custom_call.1} parent=1 // pred_check
      _
    $region7: #{tpu_custom_call.1} parent=1 // pred_check_branch
      %14 = sbr.rel (0) target = $region9
    $region8: #{tpu_custom_call.1} parent=1 // pred_region
      _
    $region9: #{tpu_custom_call.1} parent=1 // pred_fallthru
      _
    // Predicated region
    $region10: #{tpu_custom_call.1} parent=1 // pred_check
      _
    $region11: #{tpu_custom_call.1} parent=1 // pred_check_branch
      %16 = sbr.rel (0) target = $region13
    $region12: #{tpu_custom_call.1} parent=1 // pred_region
      _
    $region13: #{tpu_custom_call.1} parent=1 // pred_fallthru
      _
    // Predicated region
    $region14: #{tpu_custom_call.1} parent=1 // pred_check
      _
    $region15: #{tpu_custom_call.1} parent=1 // pred_check_branch
      %18 = sbr.rel (0) target = $region17
    $region16: #{tpu_custom_call.1} parent=1 // pred_region
      _
    $region17: #{tpu_custom_call.1} parent=1 // pred_fallthru
      _
    // Predicated region
    $region18: #{tpu_custom_call.1} parent=1 // pred_check
      _
    $region19: #{tpu_custom_call.1} parent=1 // pred_check_branch
      %20 = sbr.rel (0) target = $region21
    $region20: #{tpu_custom_call.1} parent=1 // pred_region
      _
    $region21: #{tpu_custom_call.1} parent=1 // pred_fallthru
      _
    %v22 = vld [vmem:[%s0] sm:$0xff]
    %v23 = vld [vmem:[%s0 + $0x8] sm:$0x3f]
    %26 = vst [vmem:[#allocation1] ss:$4 sm:$0xff] %v22
    %s27 = scalar_lea.vmem [#allocation1], 32
    %28 = vst [vmem:[%s27] ss:$4 sm:$0xff] %v23
    %v29 = vld.sshfl [vmem:[#allocation1] sm:$0xff pattern:$0x73625140]
    %v30 = vld.sshfl [vmem:[#allocation1 + $0x8] sm:$0xff pattern:$0x73625140]
    %v31 = vld.sshfl [vmem:[#allocation1 + $0x10] sm:$0xff pattern:$0x73625140]
    %v32 = vld.sshfl [vmem:[#allocation1 + $0x18] sm:$0xff pattern:$0x73625140]
    %v33 = vld.sshfl [vmem:[#allocation1 + $0x20] sm:$0xff pattern:$0x73625140]
    %v34 = vld.sshfl [vmem:[#allocation1 + $0x28] sm:$0xff pattern:$0x73625140]
    %v35 = vld.sshfl [vmem:[#allocation1 + $0x30] sm:$0xff pattern:$0x73625140]
    %v43 = vpack.c.bf16 %v29, %v29
    %v44 = vpack.c.bf16 %v30, %v30
    %v45 = vpack.c.bf16 %v31, %v31
    %v46 = vpack.c.bf16 %v32, %v32
    %v47 = vpack.c.bf16 %v33, %v33
    %v48 = vpack.c.bf16 %v34, %v34
    %v49 = vpack.c.bf16 %v35, %v35
    %v50 = vld [vmem:[%s1] sm:$0xf]
    %v51 = vld [vmem:[%s1 + $0x4] sm:$0xf]
    %v52 = vld [vmem:[%s1 + $0x8] sm:$0xf]
    %v53 = vld [vmem:[%s1 + $0xc] sm:$0xf]
    %v54 = vld [vmem:[%s1 + $0x10] sm:$0xf]
    %v55 = vld [vmem:[%s1 + $0x14] sm:$0xf]
    %v56 = vld [vmem:[%s1 + $0x18] sm:$0xf]
    %v57 = vld [vmem:[%s1 + $0x1c] sm:$0xf]
    %v58 = vld [vmem:[%s1 + $0x20] sm:$0xf]
    %v59 = vld [vmem:[%s1 + $0x24] sm:$0xf]
    %v60 = vld [vmem:[%s1 + $0x28] sm:$0xf]
    %v61 = vld [vmem:[%s1 + $0x2c] sm:$0xf]
    %v62 = vld [vmem:[%s1 + $0x30] sm:$0xf]
    %v63 = vld [vmem:[%s1 + $0x34] sm:$0xf]
    %v64 = vld [vmem:[%s1 + $0x38] sm:$0xf]
    %v65 = vld [vmem:[%s1 + $0x3c] sm:$0xf]
    %v66 = vld [vmem:[%s1 + $0x40] sm:$0xf]
    %v67 = vld [vmem:[%s1 + $0x44] sm:$0xf]
    %v68 = vld [vmem:[%s1 + $0x48] sm:$0xf]
    %v69 = vld [vmem:[%s1 + $0x4c] sm:$0xf]
    %v70 = vld [vmem:[%s1 + $0x50] sm:$0xf]
    %v71 = vld [vmem:[%s1 + $0x54] sm:$0xf]
    %v72 = vld [vmem:[%s1 + $0x58] sm:$0xf]
    %v73 = vld [vmem:[%s1 + $0x5c] sm:$0xf]
    %v74 = vld [vmem:[%s1 + $0x60] sm:$0xf]
    %v75 = vld [vmem:[%s1 + $0x64] sm:$0xf]
    %v76 = vld [vmem:[%s1 + $0x68] sm:$0xf]
    %v77 = vld [vmem:[%s1 + $0x6c] sm:$0xf]
    %v78 = vld [vmem:[%s1 + $0x70] sm:$0xf]
    %v79 = vld [vmem:[%s1 + $0x74] sm:$0xf]
    %v80 = vld [vmem:[%s1 + $0x78] sm:$0xf]
    %v81 = vld [vmem:[%s1 + $0x7c] sm:$0xf]
    %v82 = vld [vmem:[%s1 + $0x80] sm:$0xf]
    %v83 = vld [vmem:[%s1 + $0x84] sm:$0xf]
    %v84 = vld [vmem:[%s1 + $0x88] sm:$0xf]
    %v85 = vld [vmem:[%s1 + $0x8c] sm:$0xf]
    %v86 = vld [vmem:[%s1 + $0x90] sm:$0xf]
    %v87 = vld [vmem:[%s1 + $0x94] sm:$0xf]
    %v88 = vld [vmem:[%s1 + $0x98] sm:$0xf]
    %v89 = vld [vmem:[%s1 + $0x9c] sm:$0xf]
    %v90 = vld [vmem:[%s1 + $0xa0] sm:$0xf]
    %v91 = vld [vmem:[%s1 + $0xa4] sm:$0xf]
    %v92 = vld [vmem:[%s1 + $0xa8] sm:$0xf]
    %v93 = vld [vmem:[%s1 + $0xac] sm:$0xf]
    %v94 = vld [vmem:[%s1 + $0xb0] sm:$0xf]
    %v95 = vld [vmem:[%s1 + $0xb4] sm:$0xf]
    %v96 = vld [vmem:[%s1 + $0xb8] sm:$0xf]
    %v97 = vld [vmem:[%s1 + $0xbc] sm:$0xf]
    %v98 = vld [vmem:[%s1 + $0xc0] sm:$0xf]
    %v99 = vld [vmem:[%s1 + $0xc4] sm:$0xf]
    %v100 = vld [vmem:[%s1 + $0xc8] sm:$0xf]
    %v101 = vld [vmem:[%s1 + $0xcc] sm:$0xf]
    %v102 = vld [vmem:[%s1 + $0xd0] sm:$0xf]
    %v103 = vld [vmem:[%s1 + $0xd4] sm:$0xf]
    %v104 = vld [vmem:[%s1 + $0xd8] sm:$0xf]
    %v105 = vld [vmem:[%s1 + $0xdc] sm:$0xf]
    %v106 = vld [vmem:[%s1 + $0xe0] sm:$0xf]
    %v107 = vld [vmem:[%s1 + $0xe4] sm:$0xf]
    %v108 = vld [vmem:[%s1 + $0xe8] sm:$0xf]
    %v109 = vld [vmem:[%s1 + $0xec] sm:$0xf]
    %v110 = vld [vmem:[%s1 + $0xf0] sm:$0xf]
    %v111 = vld [vmem:[%s1 + $0xf4] sm:$0xf]
    %v112 = vld [vmem:[%s1 + $0xf8] sm:$0xf]
    %v113 = vld [vmem:[%s1 + $0xfc] sm:$0xf]
    %v114 = vld [vmem:[%s1 + $0x100] sm:$0xf]
    %v115 = vld [vmem:[%s1 + $0x104] sm:$0xf]
    %v116 = vld [vmem:[%s1 + $0x108] sm:$0xf]
    %v117 = vld [vmem:[%s1 + $0x10c] sm:$0xf]
    %v118 = vld [vmem:[%s1 + $0x110] sm:$0xf]
    %v119 = vld [vmem:[%s1 + $0x114] sm:$0xf]
    %v120 = vld [vmem:[%s1 + $0x118] sm:$0xf]
    %v121 = vld [vmem:[%s1 + $0x11c] sm:$0xf]
    %v122 = vld [vmem:[%s1 + $0x120] sm:$0xf]
    %v123 = vld [vmem:[%s1 + $0x124] sm:$0xf]
    %v124 = vld [vmem:[%s1 + $0x128] sm:$0xf]
    %v125 = vld [vmem:[%s1 + $0x12c] sm:$0xf]
    %v126 = vld [vmem:[%s1 + $0x130] sm:$0xf]
    %v127 = vld [vmem:[%s1 + $0x134] sm:$0xf]
    %v128 = vld [vmem:[%s1 + $0x138] sm:$0xf]
    %v129 = vld [vmem:[%s1 + $0x13c] sm:$0xf]
    %v130 = vld [vmem:[%s1 + $0x140] sm:$0xf]
    %v131 = vld [vmem:[%s1 + $0x144] sm:$0xf]
    %v132 = vld [vmem:[%s1 + $0x148] sm:$0xf]
    %v133 = vld [vmem:[%s1 + $0x14c] sm:$0xf]
    %v134 = vld [vmem:[%s1 + $0x150] sm:$0xf]
    %v135 = vld [vmem:[%s1 + $0x154] sm:$0xf]
    %v136 = vld [vmem:[%s1 + $0x158] sm:$0xf]
    %v137 = vld [vmem:[%s1 + $0x15c] sm:$0xf]
    %v138 = vld [vmem:[%s1 + $0x160] sm:$0xf]
    %v139 = vld [vmem:[%s1 + $0x164] sm:$0xf]
    %v140 = vld [vmem:[%s1 + $0x168] sm:$0xf]
    %v141 = vld [vmem:[%s1 + $0x16c] sm:$0xf]
    %v142 = vld [vmem:[%s1 + $0x170] sm:$0xf]
    %v143 = vld [vmem:[%s1 + $0x174] sm:$0xf]
    %v144 = vld [vmem:[%s1 + $0x178] sm:$0xf]
    %v145 = vld [vmem:[%s1 + $0x17c] sm:$0xf]
    %v146 = vld [vmem:[%s1 + $0x180] sm:$0xf]
    %v147 = vld [vmem:[%s1 + $0x184] sm:$0xf]
    %v148 = vld [vmem:[%s2] sm:$0x1]
    %v150 = vperm.slane %v148, 0
    %v250 = vunpack.c.l.b16 %v50
    %v251 = vunpack.c.l.b16 %v51
    %v252 = vunpack.c.l.b16 %v52
    %v253 = vunpack.c.l.b16 %v53
    %v254 = vunpack.c.l.b16 %v54
    %v255 = vunpack.c.l.b16 %v55
    %v256 = vunpack.c.l.b16 %v56
    %v257 = vunpack.c.l.b16 %v57
    %v258 = vunpack.c.l.b16 %v58
    %v259 = vunpack.c.l.b16 %v59
    %v260 = vunpack.c.l.b16 %v60
    %v261 = vunpack.c.l.b16 %v61
    %v262 = vunpack.c.l.b16 %v62
    %v263 = vunpack.c.l.b16 %v63
    %v264 = vunpack.c.l.b16 %v64
    %v265 = vunpack.c.l.b16 %v65
    %v266 = vunpack.c.l.b16 %v66
    %v267 = vunpack.c.l.b16 %v67
    %v268 = vunpack.c.l.b16 %v68
    %v269 = vunpack.c.l.b16 %v69
    %v270 = vunpack.c.l.b16 %v70
    %v271 = vunpack.c.l.b16 %v71
    %v272 = vunpack.c.l.b16 %v72
    %v273 = vunpack.c.l.b16 %v73
    %v274 = vunpack.c.l.b16 %v74
    %v275 = vunpack.c.l.b16 %v75
    %v276 = vunpack.c.l.b16 %v76
    %v277 = vunpack.c.l.b16 %v77
    %v278 = vunpack.c.l.b16 %v78
    %v279 = vunpack.c.l.b16 %v79
    %v280 = vunpack.c.l.b16 %v80
    %v281 = vunpack.c.l.b16 %v81
    %v282 = vunpack.c.l.b16 %v82
    %v283 = vunpack.c.l.b16 %v83
    %v284 = vunpack.c.l.b16 %v84
    %v285 = vunpack.c.l.b16 %v85
    %v286 = vunpack.c.l.b16 %v86
    %v287 = vunpack.c.l.b16 %v87
    %v288 = vunpack.c.l.b16 %v88
    %v289 = vunpack.c.l.b16 %v89
    %v290 = vunpack.c.l.b16 %v90
    %v291 = vunpack.c.l.b16 %v91
    %v292 = vunpack.c.l.b16 %v92
    %v293 = vunpack.c.l.b16 %v93
    %v294 = vunpack.c.l.b16 %v94
    %v295 = vunpack.c.l.b16 %v95
    %v296 = vunpack.c.l.b16 %v96
    %v297 = vunpack.c.l.b16 %v97
    %v298 = vunpack.c.l.b16 %v98
    %v299 = vunpack.c.l.b16 %v99
    %v300 = vunpack.c.l.b16 %v100
    %v301 = vunpack.c.l.b16 %v101
    %v302 = vunpack.c.l.b16 %v102
    %v303 = vunpack.c.l.b16 %v103
    %v304 = vunpack.c.l.b16 %v104
    %v305 = vunpack.c.l.b16 %v105
    %v306 = vunpack.c.l.b16 %v106
    %v307 = vunpack.c.l.b16 %v107
    %v308 = vunpack.c.l.b16 %v108
    %v309 = vunpack.c.l.b16 %v109
    %v310 = vunpack.c.l.b16 %v110
    %v311 = vunpack.c.l.b16 %v111
    %v312 = vunpack.c.l.b16 %v112
    %v313 = vunpack.c.l.b16 %v113
    %v314 = vunpack.c.l.b16 %v114
    %v315 = vunpack.c.l.b16 %v115
    %v316 = vunpack.c.l.b16 %v116
    %v317 = vunpack.c.l.b16 %v117
    %v318 = vunpack.c.l.b16 %v118
    %v319 = vunpack.c.l.b16 %v119
    %v320 = vunpack.c.l.b16 %v120
    %v321 = vunpack.c.l.b16 %v121
    %v322 = vunpack.c.l.b16 %v122
    %v323 = vunpack.c.l.b16 %v123
    %v324 = vunpack.c.l.b16 %v124
    %v325 = vunpack.c.l.b16 %v125
    %v326 = vunpack.c.l.b16 %v126
    %v327 = vunpack.c.l.b16 %v127
    %v328 = vunpack.c.l.b16 %v128
    %v329 = vunpack.c.l.b16 %v129
    %v330 = vunpack.c.l.b16 %v130
    %v331 = vunpack.c.l.b16 %v131
    %v332 = vunpack.c.l.b16 %v132
    %v333 = vunpack.c.l.b16 %v133
    %v334 = vunpack.c.l.b16 %v134
    %v335 = vunpack.c.l.b16 %v135
    %v336 = vunpack.c.l.b16 %v136
    %v337 = vunpack.c.l.b16 %v137
    %v338 = vunpack.c.l.b16 %v138
    %v339 = vunpack.c.l.b16 %v139
    %v340 = vunpack.c.l.b16 %v140
    %v341 = vunpack.c.l.b16 %v141
    %v342 = vunpack.c.l.b16 %v142
    %v343 = vunpack.c.l.b16 %v143
    %v344 = vunpack.c.l.b16 %v144
    %v345 = vunpack.c.l.b16 %v145
    %v346 = vunpack.c.l.b16 %v146
    %v347 = vunpack.c.l.b16 %v147
    %v348 = vpack.c.b16 %v251, %v250
    %v349 = vpack.c.b16 %v253, %v252
    %v350 = vpack.c.b16 %v255, %v254
    %v351 = vpack.c.b16 %v257, %v256
    %v352 = vpack.c.b16 %v259, %v258
    %v353 = vpack.c.b16 %v261, %v260
    %v354 = vpack.c.b16 %v263, %v262
    %v355 = vpack.c.b16 %v265, %v264
    %v356 = vpack.c.b16 %v267, %v266
    %v357 = vpack.c.b16 %v269, %v268
    %v358 = vpack.c.b16 %v271, %v270
    %v359 = vpack.c.b16 %v273, %v272
    %v360 = vpack.c.b16 %v275, %v274
    %v361 = vpack.c.b16 %v277, %v276
    %v362 = vpack.c.b16 %v279, %v278
    %v363 = vpack.c.b16 %v281, %v280
    %v364 = vpack.c.b16 %v283, %v282
    %v365 = vpack.c.b16 %v285, %v284
    %v366 = vpack.c.b16 %v287, %v286
    %v367 = vpack.c.b16 %v289, %v288
    %v368 = vpack.c.b16 %v291, %v290
    %v369 = vpack.c.b16 %v293, %v292
    %v370 = vpack.c.b16 %v295, %v294
    %v371 = vpack.c.b16 %v297, %v296
    %v372 = vpack.c.b16 %v299, %v298
    %v373 = vpack.c.b16 %v301, %v300
    %v374 = vpack.c.b16 %v303, %v302
    %v375 = vpack.c.b16 %v305, %v304
    %v376 = vpack.c.b16 %v307, %v306
    %v377 = vpack.c.b16 %v309, %v308
    %v378 = vpack.c.b16 %v311, %v310
    %v379 = vpack.c.b16 %v313, %v312
    %v380 = vpack.c.b16 %v315, %v314
    %v381 = vpack.c.b16 %v317, %v316
    %v382 = vpack.c.b16 %v319, %v318
    %v383 = vpack.c.b16 %v321, %v320
    %v384 = vpack.c.b16 %v323, %v322
    %v385 = vpack.c.b16 %v325, %v324
    %v386 = vpack.c.b16 %v327, %v326
    %v387 = vpack.c.b16 %v329, %v328
    %v388 = vpack.c.b16 %v331, %v330
    %v389 = vpack.c.b16 %v333, %v332
    %v390 = vpack.c.b16 %v335, %v334
    %v391 = vpack.c.b16 %v337, %v336
    %v392 = vpack.c.b16 %v339, %v338
    %v393 = vpack.c.b16 %v341, %v340
    %v394 = vpack.c.b16 %v343, %v342
    %v395 = vpack.c.b16 %v345, %v344
    %v396 = vpack.c.b16 %v347, %v346
    %vm446 = vcmask 130048
    %v448 = vsel %vm446, %v49, 0
    %450 = vmatpush.bf16.msra.mxu0 %v355
    %451 = vmatpush.bf16.msra.mxu0 %v354
    %452 = vmatpush.bf16.msra.mxu0 %v353
    %453 = vmatpush.bf16.msra.mxu0 %v352
    %454 = vmatpush.bf16.msra.mxu0 %v351
    %455 = vmatpush.bf16.msra.mxu0 %v350
    %456 = vmatpush.bf16.msra.mxu0 %v349
    %457 = vmatpush.bf16.msra.mxu0 %v348
    %458 = vmatmul.bf16.gmra.mxu0 %v43
    %v459 = vpop.f32.mrf.mxu0
    %v460 = vadd.f32 %v150, %v459
    %v461 = vpop.f32.mrf.mxu0
    %462 = vdwg.mxu0
    %463 = vmatpush.bf16.msra.mxu0 %v363
    %464 = vmatpush.bf16.msra.mxu0 %v362
    %465 = vmatpush.bf16.msra.mxu0 %v361
    %466 = vmatpush.bf16.msra.mxu0 %v360
    %467 = vmatpush.bf16.msra.mxu0 %v359
    %468 = vmatpush.bf16.msra.mxu0 %v358
    %469 = vmatpush.bf16.msra.mxu0 %v357
    %470 = vmatpush.bf16.msra.mxu0 %v356
    %471 = vmatmul.bf16.gmra.mxu0 %v44
    %v472 = vpop.f32.mrf.mxu0
    %v473 = vadd.f32 %v460, %v472
    %v474 = vpop.f32.mrf.mxu0
    %475 = vdwg.mxu0
    %476 = vmatpush.bf16.msra.mxu0 %v371
    %477 = vmatpush.bf16.msra.mxu0 %v370
    %478 = vmatpush.bf16.msra.mxu0 %v369
    %479 = vmatpush.bf16.msra.mxu0 %v368
    %480 = vmatpush.bf16.msra.mxu0 %v367
    %481 = vmatpush.bf16.msra.mxu0 %v366
    %482 = vmatpush.bf16.msra.mxu0 %v365
    %483 = vmatpush.bf16.msra.mxu0 %v364
    %484 = vmatmul.bf16.gmra.mxu0 %v45
    %v485 = vpop.f32.mrf.mxu0
    %v486 = vadd.f32 %v473, %v485
    %v487 = vpop.f32.mrf.mxu0
    %488 = vdwg.mxu0
    %489 = vmatpush.bf16.msra.mxu0 %v379
    %490 = vmatpush.bf16.msra.mxu0 %v378
    %491 = vmatpush.bf16.msra.mxu0 %v377
    %492 = vmatpush.bf16.msra.mxu0 %v376
    %493 = vmatpush.bf16.msra.mxu0 %v375
    %494 = vmatpush.bf16.msra.mxu0 %v374
    %495 = vmatpush.bf16.msra.mxu0 %v373
    %496 = vmatpush.bf16.msra.mxu0 %v372
    %497 = vmatmul.bf16.gmra.mxu0 %v46
    %v498 = vpop.f32.mrf.mxu0
    %v499 = vadd.f32 %v486, %v498
    %v500 = vpop.f32.mrf.mxu0
    %501 = vdwg.mxu0
    %502 = vmatpush.bf16.msra.mxu0 %v387
    %503 = vmatpush.bf16.msra.mxu0 %v386
    %504 = vmatpush.bf16.msra.mxu0 %v385
    %505 = vmatpush.bf16.msra.mxu0 %v384
    %506 = vmatpush.bf16.msra.mxu0 %v383
    %507 = vmatpush.bf16.msra.mxu0 %v382
    %508 = vmatpush.bf16.msra.mxu0 %v381
    %509 = vmatpush.bf16.msra.mxu0 %v380
    %510 = vmatmul.bf16.gmra.mxu0 %v47
    %v511 = vpop.f32.mrf.mxu0
    %v512 = vadd.f32 %v499, %v511
    %v513 = vpop.f32.mrf.mxu0
    %514 = vdwg.mxu0
    %515 = vmatpush.bf16.msra.mxu0 %v395
    %516 = vmatpush.bf16.msra.mxu0 %v394
    %517 = vmatpush.bf16.msra.mxu0 %v393
    %518 = vmatpush.bf16.msra.mxu0 %v392
    %519 = vmatpush.bf16.msra.mxu0 %v391
    %520 = vmatpush.bf16.msra.mxu0 %v390
    %521 = vmatpush.bf16.msra.mxu0 %v389
    %522 = vmatpush.bf16.msra.mxu0 %v388
    %523 = vmatmul.bf16.gmra.mxu0 %v48
    %v524 = vpop.f32.mrf.mxu0
    %v525 = vadd.f32 %v512, %v524
    %v526 = vpop.f32.mrf.mxu0
    %527 = vdwg.mxu0
    %528 = vmatpush.bf16.msra.mxu0 0
    %529 = vmatpush.bf16.msra.mxu0 0
    %530 = vmatpush.bf16.msra.mxu0 0
    %531 = vmatpush.bf16.msra.mxu0 0
    %532 = vmatpush.bf16.msra.mxu0 0
    %533 = vmatpush.bf16.msra.mxu0 0
    %534 = vmatpush.bf16.msra.mxu0 0
    %535 = vmatpush.bf16.msra.mxu0 %v396
    %536 = vmatmul.bf16.gmra.mxu0 %v448
    %v537 = vpop.f32.mrf.mxu0
    %v538 = vadd.f32 %v525, %v537
    %v539 = vpop.f32.mrf.mxu0
    %540 = vdwg.mxu0
    %vm541 = vcmp.gt.f32.partialorder %v538, 0.0
    %v542 = vmul.f32 %v538, 0.01
    %v543 = vsel %vm541, %v538, %v542
    %v544 = vpack.c.bf16 %v543, %v543
    %v545 = vld [vmem:[%s3] sm:$0xf]
    %v546 = vld [vmem:[%s3 + $0x4] sm:$0xf]
    %v547 = vld [vmem:[%s3 + $0x8] sm:$0xf]
    %v548 = vld [vmem:[%s3 + $0xc] sm:$0xf]
    %v549 = vld [vmem:[%s4] sm:$0x1]
    %v551 = vperm.slane %v549, 0
    %v557 = vunpack.c.l.b16 %v545
    %v558 = vunpack.c.l.b16 %v546
    %v559 = vunpack.c.l.b16 %v547
    %v560 = vunpack.c.l.b16 %v548
    %v561 = vpack.c.b16 %v558, %v557
    %v562 = vpack.c.b16 %v560, %v559
    %vm565 = vcmask 261120
    %v567 = vsel %vm565, %v544, 0
    %569 = vmatpush.bf16.msra.mxu0 0
    %570 = vmatpush.bf16.msra.mxu0 0
    %571 = vmatpush.bf16.msra.mxu0 0
    %572 = vmatpush.bf16.msra.mxu0 0
    %573 = vmatpush.bf16.msra.mxu0 0
    %574 = vmatpush.bf16.msra.mxu0 0
    %575 = vmatpush.bf16.msra.mxu0 %v562
    %576 = vmatpush.bf16.msra.mxu0 %v561
    %577 = vmatmul.bf16.gmra.mxu0 %v567
    %v578 = vpop.f32.mrf.mxu0
    %v579 = vadd.f32 %v551, %v578
    %v580 = vpop.f32.mrf.mxu0
    %581 = vdwg.mxu0
    %vm582 = vcmask 74752
    %583 = vst.msk [vmem:[#allocation2] sm:$0x3] %vm582, %v579
    // Predicated region
    $region22: #{tpu_custom_call.1} parent=1 // pred_check
      _
    $region23: #{tpu_custom_call.1} parent=1 // pred_check_branch
      %585 = sbr.rel (0) target = $region25
    $region24: #{tpu_custom_call.1} parent=1 // pred_region
      %587 = vsyncadd [#allocation3], 0
      %s589 = sshll.u32 [#allocation2], 4
      %s590 = int_to_ptr.vmem [resolvable:$true] %s589
      %s591 = sshll.u32 %s5, 4
      %s592 = int_to_ptr.hbm [resolvable:$true] %s591
      %594 = dma.vmem_to_hbm [thread:$0]  %s590, 32, %s592, [#allocation3]
    $region25: #{tpu_custom_call.1} parent=1 // pred_fallthru
      _
    // Predicated region
    $region26: #{tpu_custom_call.1} parent=1 // pred_check
      _
    $region27: #{tpu_custom_call.1} parent=1 // pred_check_branch
      %596 = sbr.rel (0) target = $region29
    $region28: #{tpu_custom_call.1} parent=1 // pred_region
      %598 = dma.done [#allocation3], 32
    $region29: #{tpu_custom_call.1} parent=1 // pred_fallthru
      _
    %599 = vsyncpa [#allocation3], 1

</llo_original>
